<compile_context>
chip_gen: v6e
topology: v6e:2x2x1
jax: 0.10.0
libtpu: 0.0.40
codegen_flags: <defaults>
</compile_context>

<pallas_src>
import math

import jax
import jax.numpy as jnp
from jax import lax
from jax.experimental import pallas as pl
from jax.experimental.pallas import tpu as pltpu


def _round_up(x, m):
    return ((x + m - 1) // m) * m


# ----------------------------------------------------------------------------
# Pallas kernel: PointConv hot path.
# grid = (B, S_pad // TS); one grid step owns one (batch, S-tile) and reduces all
# K neighbor slots in-body, so the grid stays 2-D ("parallel","parallel").
#
# Per-step refs:
#   idx_ref   [1, TS, K]         int32  neighbor ids, -1 = invalid / padded edge
#   ptw1_ref  [1, N_pad, H_pad]  f32    per-point table  [x_j | pos_j] @ W1   (layer 1 hoisted)
#   ctrb1_ref [1, TS, H_pad]     f32    per-center bias  b1 - pos_i @ W1_pos
#   w2_ref    [H_pad, C_out_pad] bf16
#   b2_ref    [1, C_out_pad]     f32
#   out_ref   [1, TS, C_out_pad] f32    max-aggregated PointConv features
# ----------------------------------------------------------------------------
def pointconv_kernel(idx_ref, ptw1_ref, ctrb1_ref, w2_ref, b2_ref, out_ref):
    idx_all = idx_ref[0]                 # [TS, K] int32 (one lane-dense load per tile)
    table = ptw1_ref[0]                  # [N_pad, H_pad] f32, VMEM resident
    ctr_b1 = ctrb1_ref[0]                # [TS, H_pad] f32
    w2 = w2_ref[...]                     # [H_pad, C_out_pad] bf16
    b2 = b2_ref[...]                     # [1, C_out_pad] f32

    ts = idx_all.shape[0]
    n_slots = idx_all.shape[1]
    h_pad = table.shape[1]

    acc = jnp.zeros((ts, b2.shape[1]), jnp.float32)
    # K is small and static -> fully unrolled loop with static lane slices;
    # only the running max is loop-carried.
    for k in range(n_slots):
        jcol = idx_all[:, k:k + 1]                        # [TS, 1] int32
        valid = jcol >= 0                                 # [TS, 1]
        jsafe = jnp.where(valid, jcol, 0)                 # clamp -> gather is in-bounds
        # Real in-VMEM gather of the pre-projected neighbor features.
        # (Replaces the previous O(TS*N) one-hot matmul gather.)
        jmat = jnp.broadcast_to(jsafe, (ts, h_pad))       # [TS, H_pad] int32
        h = jnp.take_along_axis(table, jmat, axis=0,
                                mode="promise_in_bounds") + ctr_b1      # [TS, H_pad] f32
        h = jnp.maximum(h, 0.0)                           # layer-1 output (f32)
        y = jnp.dot(h.astype(jnp.bfloat16), w2,
                    preferred_element_type=jnp.float32) + b2
        y = jnp.maximum(y, 0.0)                           # layer-2 output, >= 0
        # Zero-init max + zeroing invalid edges is only valid because the MLP ends
        # in ReLU (y >= 0); empty neighborhoods then produce 0, PyG's fill value.
        acc = jnp.maximum(acc, jnp.where(valid, y, 0.0))
    out_ref[0] = acc


def pointconv_pallas(nbr_idx, pt_w1, ctr_b1, w2p, b2p, *, ts):
    B, S_pad, K = nbr_idx.shape
    N_pad, H_pad = pt_w1.shape[1], pt_w1.shape[2]
    C_out_pad = w2p.shape[1]
    grid = (B, S_pad // ts)

    # VMEM budget from actual (double-buffered) block sizes + working headroom.
    # TODO(synk): for very large N single-buffer the pt_w1 block
    # (pipeline_mode=pl.Buffered(1)) or tile / DMA-gather it from HBM so it fits
    # v7x's 64 MiB per-core VMEM (it comfortably fits v5e/v6e's 128 MiB).
    need = 2 * (ts * K * 4 + ts * H_pad * 4 + ts * C_out_pad * 4
                + N_pad * H_pad * 4 + H_pad * C_out_pad * 2 + C_out_pad * 4)
    vmem_limit = int(max(need + (4 << 20), 16 << 20))

    return pl.pallas_call(
        pointconv_kernel,
        out_shape=jax.ShapeDtypeStruct((B, S_pad, C_out_pad), jnp.float32),
        grid=grid,
        in_specs=[
            pl.BlockSpec((1, ts, K), lambda b, si: (b, si, 0)),         # neighbor ids
            pl.BlockSpec((1, N_pad, H_pad), lambda b, si: (b, 0, 0)),   # point table (pt @ W1)
            pl.BlockSpec((1, ts, H_pad), lambda b, si: (b, si, 0)),     # b1 - ctr @ W1_pos
            pl.BlockSpec((H_pad, C_out_pad), lambda b, si: (0, 0)),     # W2
            pl.BlockSpec((1, C_out_pad), lambda b, si: (0, 0)),         # b2
        ],
        out_specs=pl.BlockSpec((1, ts, C_out_pad), lambda b, si: (b, si, 0)),
        compiler_params=pltpu.CompilerParams(
            dimension_semantics=("parallel", "parallel"),
            vmem_limit_bytes=vmem_limit,
        ),
    )(nbr_idx, pt_w1, ctr_b1, w2p, b2p)


# ----------------------------------------------------------------------------
# Glue: farthest point sampling + radius neighbor search (data dependent -> JAX).
# TODO(synk): at real N this sequential fps / dense [S,N] radius search dominates
# wall-clock (Amdahl); longer term they should also be fused into Pallas.
# ----------------------------------------------------------------------------
def fps_dense(pos, num_samples):
    # pos: [N, 3]. Deterministic start at index 0 (PyG fps uses a random start).
    N = pos.shape[0]

    def body(i, carry):
        sel, dists = carry
        last = sel[i - 1]
        d = jnp.sum((pos - pos[last]) ** 2, axis=-1)
        dists = jnp.minimum(dists, d)
        nxt = jnp.argmax(dists).astype(jnp.int32)
        sel = sel.at[i].set(nxt)
        return sel, dists

    sel0 = jnp.zeros((num_samples,), jnp.int32)
    dists0 = jnp.full((N,), jnp.inf, jnp.float32)
    sel, _ = lax.fori_loop(1, num_samples, body, (sel0, dists0))
    return sel


def radius_dense(pos, centers, r, K):
    # pos: [N,3], centers: [S,3] -> up to K neighbors (lowest indices) within r; -1 pads.
    N = pos.shape[0]
    d2 = jnp.sum((centers[:, None, :] - pos[None, :, :]) ** 2, axis=-1)   # [S, N]
    valid = d2 <= r * r
    key = jnp.where(valid, jnp.arange(N, dtype=jnp.int32)[None, :], N)
    topv, _ = lax.top_k(-key, K)                                          # K smallest keys
    idx = -topv                                                           # [S, K]
    return jnp.where(idx < N, idx, -1).astype(jnp.int32)


def sample_and_group(pos, *, ratio, r, K):
    B, N, _ = pos.shape
    S = math.ceil(N * ratio)
    idx = jax.vmap(lambda p: fps_dense(p, S))(pos)                        # [B, S]
    centers = jnp.take_along_axis(pos, idx[..., None], axis=1)            # [B, S, 3]
    nbr_idx = jax.vmap(lambda p, c: radius_dense(p, c, r, K))(pos, centers)   # [B, S, K]
    return centers, nbr_idx


def sa_module_forward(x, pos, *, ratio, r, K, w1, b1, w2, b2):
    B, N, C_in = x.shape
    F_in = C_in + 3
    H = w1.shape[1]
    C_out = w2.shape[1]
    S = math.ceil(N * ratio)

    H_pad = _round_up(H, 128)
    C_out_pad = _round_up(C_out, 128)
    N_pad = _round_up(N, 8)

    # Tile size over centers: big tiles amortize the ~0.35us/step overhead on
    # v5e/v6e (128 MiB VMEM).  On v7x (64 MiB/TC) drop toward 256 when the
    # pt_w1 table is large; B >= 2 keeps both v7x TensorCores busy.
    if S <= 512:
        S_pad = _round_up(S, 8)
        TS = S_pad
    else:
        TS = 512
        S_pad = _round_up(S, TS)

    # 1./2. farthest point sampling + radius neighborhoods.
    centers, nbr_idx = sample_and_group(pos, ratio=ratio, r=r, K=K)       # [B,S,3], [B,S,K]
    nbr_idx = jnp.pad(nbr_idx, ((0, 0), (0, S_pad - S), (0, 0)), constant_values=-1)

    # 3. Hoist MLP layer 1 out of the edge loop (amortized over N points instead of
    #    S*K edges) and fold the center term into the bias, all in f32:
    #      relu([x_j | pos_j - pos_i] @ W1 + b1)
    #    = relu(([x_j | pos_j] @ W1) + (b1 - pos_i @ W1_pos))
    w1p = jnp.pad(w1, ((0, 0), (0, H_pad - H))).astype(jnp.float32)       # [F_in, H_pad]
    b1p = jnp.pad(b1, ((0, 0), (0, H_pad - H))).astype(jnp.float32)       # [1, H_pad]
    pt = jnp.concatenate([x, pos], axis=-1).astype(jnp.float32)           # [B, N, F_in]
    pt_w1 = jnp.einsum("bnf,fh->bnh", pt, w1p)                            # [B, N, H_pad] f32
    pt_w1 = jnp.pad(pt_w1, ((0, 0), (0, N_pad - N), (0, 0)))
    ctr_b1 = b1p[None, :, :] - jnp.einsum("bsd,dh->bsh",
                                          centers, w1p[C_in:C_in + 3, :])  # [B, S, H_pad]
    ctr_b1 = jnp.pad(ctr_b1, ((0, 0), (0, S_pad - S), (0, 0)))

    # 4. Lane-dense padded layer-2 weights; bf16 only for the MXU operands.
    #    TODO(synk): BatchNorm layers of the original PyG MLP omitted (inference affine only).
    w2p = jnp.pad(w2, ((0, H_pad - H), (0, C_out_pad - C_out))).astype(jnp.bfloat16)
    b2p = jnp.pad(b2, ((0, 0), (0, C_out_pad - C_out))).astype(jnp.float32)

    # 5. PointConv local MLP + masked max aggregation (Pallas kernel).
    out = pointconv_pallas(nbr_idx, pt_w1, ctr_b1, w2p, b2p, ts=TS)       # [B,S_pad,C_out_pad]
    return out[:, :S, :C_out], centers


# ----------------------------------------------------------------------------
if __name__ == "__main__":
    key = jax.random.PRNGKey(0)
    B, N, C_in = 2, 8, 4
    ratio, r, K = 0.5, 0.75, 8
    H, C_out = 32, 32

    k1, k2, k3, k4, k5, k6 = jax.random.split(key, 6)
    pos = jax.random.uniform(k1, (B, N, 3), dtype=jnp.float32)
    x = jax.random.normal(k2, (B, N, C_in), dtype=jnp.float32)

    # local MLP = Linear(C_in+3 -> H) + ReLU + Linear(H -> C_out) + ReLU
    F_in = C_in + 3
    w1 = jax.random.normal(k3, (F_in, H), dtype=jnp.float32) / math.sqrt(F_in)
    b1 = jax.random.normal(k4, (1, H), dtype=jnp.float32) * 0.01
    w2 = jax.random.normal(k5, (H, C_out), dtype=jnp.float32) / math.sqrt(H)
    b2 = jax.random.normal(k6, (1, C_out), dtype=jnp.float32) * 0.01

    x_out, pos_out = sa_module_forward(
        x, pos, ratio=ratio, r=r, K=K, w1=w1, b1=b1, w2=w2, b2=b2
    )
    jax.block_until_ready((x_out, pos_out))

    S = math.ceil(N * ratio)
    assert x_out.shape == (B, S, C_out)
    assert pos_out.shape == (B, S, 3)
    assert bool(jnp.all(jnp.isfinite(x_out)))

    # Pure-JAX reference of the same PointConv (f32 everywhere) as a sanity check.
    centers_ref, nbr_ref = sample_and_group(pos, ratio=ratio, r=r, K=K)

    def ref_one(xb, posb, ctrb, idxb):
        valid = idxb >= 0
        safe = jnp.where(valid, idxb, 0)
        x_j = xb[safe]                                     # [S, K, C_in]
        rel = posb[safe] - ctrb[:, None, :]                # [S, K, 3]
        feat = jnp.concatenate([x_j, rel], axis=-1)        # [S, K, F_in]
        h = jnp.maximum(feat @ w1 + b1, 0.0)
        y = jnp.maximum(h @ w2 + b2, 0.0)
        y = jnp.where(valid[..., None], y, 0.0)
        return jnp.max(y, axis=1)                          # [S, C_out]

    ref = jax.vmap(ref_one)(x, pos, centers_ref, nbr_ref)
    assert jnp.allclose(x_out, ref, atol=0.1, rtol=0.1), float(
        jnp.max(jnp.abs(x_out - ref)))
    print("KERNEL_OK")
</pallas_src>

<mosaic_0001>
module attributes {stable_mosaic.version = 11 : i64} {
  func.func @pointconv_kernel(%arg0: i32, %arg1: i32, %arg2: memref<1x8x8xi32, #tpu.memory_space<vmem>>, %arg3: memref<1x8x128xf32, #tpu.memory_space<vmem>>, %arg4: memref<1x8x128xf32, #tpu.memory_space<vmem>>, %arg5: memref<128x128xbf16, #tpu.memory_space<vmem>>, %arg6: memref<1x128xf32, #tpu.memory_space<vmem>>, %arg7: memref<1x8x128xf32, #tpu.memory_space<vmem>>) attributes {dimension_semantics = [#tpu.dimension_semantics<parallel>, #tpu.dimension_semantics<parallel>], iteration_bounds = array<i64: 2, 1>, scalar_prefetch = 0 : i64, scratch_operands = 0 : i64, tpu.core_type = #tpu.core_type<tc>, window_params = [{transform_indices = @transform_0, window_bounds = array<i64: 1, 8, 8>}, {transform_indices = @transform_1, window_bounds = array<i64: 1, 8, 128>}, {transform_indices = @transform_2, window_bounds = array<i64: 1, 8, 128>}, {pipeline_mode = #tpu.pipeline_mode<synchronous>, transform_indices = @transform_3, window_bounds = array<i64: 128, 128>}, {pipeline_mode = #tpu.pipeline_mode<synchronous>, transform_indices = @transform_4, window_bounds = array<i64: 1, 128>}, {transform_indices = @transform_5, window_bounds = array<i64: 1, 8, 128>}]} {
    %c0 = arith.constant 0 : index
    %c0_0 = arith.constant 0 : index
    %c0_1 = arith.constant 0 : index
    %0 = vector.load %arg2[%c0, %c0_0, %c0_1] : memref<1x8x8xi32, #tpu.memory_space<vmem>>, vector<1x8x8xi32>
    %1 = vector.shape_cast %0 : vector<1x8x8xi32> to vector<8x8xi32>
    %c0_2 = arith.constant 0 : index
    %c0_3 = arith.constant 0 : index
    %c0_4 = arith.constant 0 : index
    %2 = vector.load %arg3[%c0_2, %c0_3, %c0_4] : memref<1x8x128xf32, #tpu.memory_space<vmem>>, vector<1x8x128xf32>
    %3 = vector.shape_cast %2 : vector<1x8x128xf32> to vector<8x128xf32>
    %c0_5 = arith.constant 0 : index
    %c0_6 = arith.constant 0 : index
    %c0_7 = arith.constant 0 : index
    %4 = vector.load %arg4[%c0_5, %c0_6, %c0_7] : memref<1x8x128xf32, #tpu.memory_space<vmem>>, vector<1x8x128xf32>
    %5 = vector.shape_cast %4 : vector<1x8x128xf32> to vector<8x128xf32>
    %c0_8 = arith.constant 0 : index
    %c0_9 = arith.constant 0 : index
    %6 = vector.load %arg5[%c0_8, %c0_9] : memref<128x128xbf16, #tpu.memory_space<vmem>>, vector<128x128xbf16>
    %c0_10 = arith.constant 0 : index
    %c0_11 = arith.constant 0 : index
    %7 = vector.load %arg6[%c0_10, %c0_11] : memref<1x128xf32, #tpu.memory_space<vmem>>, vector<1x128xf32>
    %cst = arith.constant 0.000000e+00 : f32
    %8 = vector.broadcast %cst : f32 to vector<8x128xf32>
    %9 = vector.extract_strided_slice %1 {offsets = [0, 0], sizes = [8, 1], strides = [1, 1]} : vector<8x8xi32> to vector<8x1xi32>
    %c0_i32 = arith.constant 0 : i32
    %10 = vector.broadcast %c0_i32 : i32 to vector<8x1xi32>
    %11 = arith.cmpi sge, %9, %10 : vector<8x1xi32>
    %c0_i32_12 = arith.constant 0 : i32
    %12 = vector.broadcast %c0_i32_12 : i32 to vector<8x1xi32>
    %13 = arith.select %11, %9, %12 : vector<8x1xi1>, vector<8x1xi32>
    %14 = vector.shape_cast %13 : vector<8x1xi32> to vector<8x1xi32>
    %15 = vector.broadcast %14 : vector<8x1xi32> to vector<8x128xi32>
    %16 = vector.shape_cast %15 : vector<8x128xi32> to vector<8x128x1xi32>
    %17 = vector.shape_cast %16 : vector<8x128x1xi32> to vector<8x128xi32>
    %18 = tpu.dynamic_gather %3[%17] in [0] : vector<8x128xf32>, vector<8x128xi32> -> vector<8x128xf32>
    %19 = arith.addf %18, %5 : vector<8x128xf32>
    %cst_13 = arith.constant 0.000000e+00 : f32
    %20 = vector.broadcast %cst_13 : f32 to vector<8x128xf32>
    %21 = arith.maximumf %19, %20 : vector<8x128xf32>
    %22 = arith.truncf %21 : vector<8x128xf32> to vector<8x128xbf16>
    %cst_14 = arith.constant dense<0.000000e+00> : vector<8x128xf32>
    %23 = tpu.matmul %22, %6, %cst_14 {dimension_numbers = #tpu.dot_dimension_numbers<[1], [0], [0], [1], [0, 0, 1, 1], [], []>} : vector<8x128xbf16>, vector<128x128xbf16>, vector<8x128xf32> -> vector<8x128xf32>
    %24 = vector.broadcast %7 : vector<1x128xf32> to vector<8x128xf32>
    %25 = arith.addf %23, %24 : vector<8x128xf32>
    %cst_15 = arith.constant 0.000000e+00 : f32
    %26 = vector.broadcast %cst_15 : f32 to vector<8x128xf32>
    %27 = arith.maximumf %25, %26 : vector<8x128xf32>
    %cst_16 = arith.constant 0.000000e+00 : f32
    %28 = vector.shape_cast %11 : vector<8x1xi1> to vector<8x1xi1>
    %29 = vector.broadcast %28 : vector<8x1xi1> to vector<8x128xi1>
    %30 = vector.broadcast %cst_16 : f32 to vector<8x128xf32>
    %31 = arith.select %29, %27, %30 : vector<8x128xi1>, vector<8x128xf32>
    %32 = arith.maximumf %8, %31 : vector<8x128xf32>
    %33 = vector.extract_strided_slice %1 {offsets = [0, 1], sizes = [8, 1], strides = [1, 1]} : vector<8x8xi32> to vector<8x1xi32>
    %c0_i32_17 = arith.constant 0 : i32
    %34 = vector.broadcast %c0_i32_17 : i32 to vector<8x1xi32>
    %35 = arith.cmpi sge, %33, %34 : vector<8x1xi32>
    %c0_i32_18 = arith.constant 0 : i32
    %36 = vector.broadcast %c0_i32_18 : i32 to vector<8x1xi32>
    %37 = arith.select %35, %33, %36 : vector<8x1xi1>, vector<8x1xi32>
    %38 = vector.shape_cast %37 : vector<8x1xi32> to vector<8x1xi32>
    %39 = vector.broadcast %38 : vector<8x1xi32> to vector<8x128xi32>
    %40 = vector.shape_cast %39 : vector<8x128xi32> to vector<8x128x1xi32>
    %41 = vector.shape_cast %40 : vector<8x128x1xi32> to vector<8x128xi32>
    %42 = tpu.dynamic_gather %3[%41] in [0] : vector<8x128xf32>, vector<8x128xi32> -> vector<8x128xf32>
    %43 = arith.addf %42, %5 : vector<8x128xf32>
    %cst_19 = arith.constant 0.000000e+00 : f32
    %44 = vector.broadcast %cst_19 : f32 to vector<8x128xf32>
    %45 = arith.maximumf %43, %44 : vector<8x128xf32>
    %46 = arith.truncf %45 : vector<8x128xf32> to vector<8x128xbf16>
    %cst_20 = arith.constant dense<0.000000e+00> : vector<8x128xf32>
    %47 = tpu.matmul %46, %6, %cst_20 {dimension_numbers = #tpu.dot_dimension_numbers<[1], [0], [0], [1], [0, 0, 1, 1], [], []>} : vector<8x128xbf16>, vector<128x128xbf16>, vector<8x128xf32> -> vector<8x128xf32>
    %48 = vector.broadcast %7 : vector<1x128xf32> to vector<8x128xf32>
    %49 = arith.addf %47, %48 : vector<8x128xf32>
    %cst_21 = arith.constant 0.000000e+00 : f32
    %50 = vector.broadcast %cst_21 : f32 to vector<8x128xf32>
    %51 = arith.maximumf %49, %50 : vector<8x128xf32>
    %cst_22 = arith.constant 0.000000e+00 : f32
    %52 = vector.shape_cast %35 : vector<8x1xi1> to vector<8x1xi1>
    %53 = vector.broadcast %52 : vector<8x1xi1> to vector<8x128xi1>
    %54 = vector.broadcast %cst_22 : f32 to vector<8x128xf32>
    %55 = arith.select %53, %51, %54 : vector<8x128xi1>, vector<8x128xf32>
    %56 = arith.maximumf %32, %55 : vector<8x128xf32>
    %57 = vector.extract_strided_slice %1 {offsets = [0, 2], sizes = [8, 1], strides = [1, 1]} : vector<8x8xi32> to vector<8x1xi32>
    %c0_i32_23 = arith.constant 0 : i32
    %58 = vector.broadcast %c0_i32_23 : i32 to vector<8x1xi32>
    %59 = arith.cmpi sge, %57, %58 : vector<8x1xi32>
    %c0_i32_24 = arith.constant 0 : i32
    %60 = vector.broadcast %c0_i32_24 : i32 to vector<8x1xi32>
    %61 = arith.select %59, %57, %60 : vector<8x1xi1>, vector<8x1xi32>
    %62 = vector.shape_cast %61 : vector<8x1xi32> to vector<8x1xi32>
    %63 = vector.broadcast %62 : vector<8x1xi32> to vector<8x128xi32>
    %64 = vector.shape_cast %63 : vector<8x128xi32> to vector<8x128x1xi32>
    %65 = vector.shape_cast %64 : vector<8x128x1xi32> to vector<8x128xi32>
    %66 = tpu.dynamic_gather %3[%65] in [0] : vector<8x128xf32>, vector<8x128xi32> -> vector<8x128xf32>
    %67 = arith.addf %66, %5 : vector<8x128xf32>
    %cst_25 = arith.constant 0.000000e+00 : f32
    %68 = vector.broadcast %cst_25 : f32 to vector<8x128xf32>
    %69 = arith.maximumf %67, %68 : vector<8x128xf32>
    %70 = arith.truncf %69 : vector<8x128xf32> to vector<8x128xbf16>
    %cst_26 = arith.constant dense<0.000000e+00> : vector<8x128xf32>
    %71 = tpu.matmul %70, %6, %cst_26 {dimension_numbers = #tpu.dot_dimension_numbers<[1], [0], [0], [1], [0, 0, 1, 1], [], []>} : vector<8x128xbf16>, vector<128x128xbf16>, vector<8x128xf32> -> vector<8x128xf32>
    %72 = vector.broadcast %7 : vector<1x128xf32> to vector<8x128xf32>
    %73 = arith.addf %71, %72 : vector<8x128xf32>
    %cst_27 = arith.constant 0.000000e+00 : f32
    %74 = vector.broadcast %cst_27 : f32 to vector<8x128xf32>
    %75 = arith.maximumf %73, %74 : vector<8x128xf32>
    %cst_28 = arith.constant 0.000000e+00 : f32
    %76 = vector.shape_cast %59 : vector<8x1xi1> to vector<8x1xi1>
    %77 = vector.broadcast %76 : vector<8x1xi1> to vector<8x128xi1>
    %78 = vector.broadcast %cst_28 : f32 to vector<8x128xf32>
    %79 = arith.select %77, %75, %78 : vector<8x128xi1>, vector<8x128xf32>
    %80 = arith.maximumf %56, %79 : vector<8x128xf32>
    %81 = vector.extract_strided_slice %1 {offsets = [0, 3], sizes = [8, 1], strides = [1, 1]} : vector<8x8xi32> to vector<8x1xi32>
    %c0_i32_29 = arith.constant 0 : i32
    %82 = vector.broadcast %c0_i32_29 : i32 to vector<8x1xi32>
    %83 = arith.cmpi sge, %81, %82 : vector<8x1xi32>
    %c0_i32_30 = arith.constant 0 : i32
    %84 = vector.broadcast %c0_i32_30 : i32 to vector<8x1xi32>
    %85 = arith.select %83, %81, %84 : vector<8x1xi1>, vector<8x1xi32>
    %86 = vector.shape_cast %85 : vector<8x1xi32> to vector<8x1xi32>
    %87 = vector.broadcast %86 : vector<8x1xi32> to vector<8x128xi32>
    %88 = vector.shape_cast %87 : vector<8x128xi32> to vector<8x128x1xi32>
    %89 = vector.shape_cast %88 : vector<8x128x1xi32> to vector<8x128xi32>
    %90 = tpu.dynamic_gather %3[%89] in [0] : vector<8x128xf32>, vector<8x128xi32> -> vector<8x128xf32>
    %91 = arith.addf %90, %5 : vector<8x128xf32>
    %cst_31 = arith.constant 0.000000e+00 : f32
    %92 = vector.broadcast %cst_31 : f32 to vector<8x128xf32>
    %93 = arith.maximumf %91, %92 : vector<8x128xf32>
    %94 = arith.truncf %93 : vector<8x128xf32> to vector<8x128xbf16>
    %cst_32 = arith.constant dense<0.000000e+00> : vector<8x128xf32>
    %95 = tpu.matmul %94, %6, %cst_32 {dimension_numbers = #tpu.dot_dimension_numbers<[1], [0], [0], [1], [0, 0, 1, 1], [], []>} : vector<8x128xbf16>, vector<128x128xbf16>, vector<8x128xf32> -> vector<8x128xf32>
    %96 = vector.broadcast %7 : vector<1x128xf32> to vector<8x128xf32>
    %97 = arith.addf %95, %96 : vector<8x128xf32>
    %cst_33 = arith.constant 0.000000e+00 : f32
    %98 = vector.broadcast %cst_33 : f32 to vector<8x128xf32>
    %99 = arith.maximumf %97, %98 : vector<8x128xf32>
    %cst_34 = arith.constant 0.000000e+00 : f32
    %100 = vector.shape_cast %83 : vector<8x1xi1> to vector<8x1xi1>
    %101 = vector.broadcast %100 : vector<8x1xi1> to vector<8x128xi1>
    %102 = vector.broadcast %cst_34 : f32 to vector<8x128xf32>
    %103 = arith.select %101, %99, %102 : vector<8x128xi1>, vector<8x128xf32>
    %104 = arith.maximumf %80, %103 : vector<8x128xf32>
    %105 = vector.extract_strided_slice %1 {offsets = [0, 4], sizes = [8, 1], strides = [1, 1]} : vector<8x8xi32> to vector<8x1xi32>
    %c0_i32_35 = arith.constant 0 : i32
    %106 = vector.broadcast %c0_i32_35 : i32 to vector<8x1xi32>
    %107 = arith.cmpi sge, %105, %106 : vector<8x1xi32>
    %c0_i32_36 = arith.constant 0 : i32
    %108 = vector.broadcast %c0_i32_36 : i32 to vector<8x1xi32>
    %109 = arith.select %107, %105, %108 : vector<8x1xi1>, vector<8x1xi32>
    %110 = vector.shape_cast %109 : vector<8x1xi32> to vector<8x1xi32>
    %111 = vector.broadcast %110 : vector<8x1xi32> to vector<8x128xi32>
    %112 = vector.shape_cast %111 : vector<8x128xi32> to vector<8x128x1xi32>
    %113 = vector.shape_cast %112 : vector<8x128x1xi32> to vector<8x128xi32>
    %114 = tpu.dynamic_gather %3[%113] in [0] : vector<8x128xf32>, vector<8x128xi32> -> vector<8x128xf32>
    %115 = arith.addf %114, %5 : vector<8x128xf32>
    %cst_37 = arith.constant 0.000000e+00 : f32
    %116 = vector.broadcast %cst_37 : f32 to vector<8x128xf32>
    %117 = arith.maximumf %115, %116 : vector<8x128xf32>
    %118 = arith.truncf %117 : vector<8x128xf32> to vector<8x128xbf16>
    %cst_38 = arith.constant dense<0.000000e+00> : vector<8x128xf32>
    %119 = tpu.matmul %118, %6, %cst_38 {dimension_numbers = #tpu.dot_dimension_numbers<[1], [0], [0], [1], [0, 0, 1, 1], [], []>} : vector<8x128xbf16>, vector<128x128xbf16>, vector<8x128xf32> -> vector<8x128xf32>
    %120 = vector.broadcast %7 : vector<1x128xf32> to vector<8x128xf32>
    %121 = arith.addf %119, %120 : vector<8x128xf32>
    %cst_39 = arith.constant 0.000000e+00 : f32
    %122 = vector.broadcast %cst_39 : f32 to vector<8x128xf32>
    %123 = arith.maximumf %121, %122 : vector<8x128xf32>
    %cst_40 = arith.constant 0.000000e+00 : f32
    %124 = vector.shape_cast %107 : vector<8x1xi1> to vector<8x1xi1>
    %125 = vector.broadcast %124 : vector<8x1xi1> to vector<8x128xi1>
    %126 = vector.broadcast %cst_40 : f32 to vector<8x128xf32>
    %127 = arith.select %125, %123, %126 : vector<8x128xi1>, vector<8x128xf32>
    %128 = arith.maximumf %104, %127 : vector<8x128xf32>
    %129 = vector.extract_strided_slice %1 {offsets = [0, 5], sizes = [8, 1], strides = [1, 1]} : vector<8x8xi32> to vector<8x1xi32>
    %c0_i32_41 = arith.constant 0 : i32
    %130 = vector.broadcast %c0_i32_41 : i32 to vector<8x1xi32>
    %131 = arith.cmpi sge, %129, %130 : vector<8x1xi32>
    %c0_i32_42 = arith.constant 0 : i32
    %132 = vector.broadcast %c0_i32_42 : i32 to vector<8x1xi32>
    %133 = arith.select %131, %129, %132 : vector<8x1xi1>, vector<8x1xi32>
    %134 = vector.shape_cast %133 : vector<8x1xi32> to vector<8x1xi32>
    %135 = vector.broadcast %134 : vector<8x1xi32> to vector<8x128xi32>
    %136 = vector.shape_cast %135 : vector<8x128xi32> to vector<8x128x1xi32>
    %137 = vector.shape_cast %136 : vector<8x128x1xi32> to vector<8x128xi32>
    %138 = tpu.dynamic_gather %3[%137] in [0] : vector<8x128xf32>, vector<8x128xi32> -> vector<8x128xf32>
    %139 = arith.addf %138, %5 : vector<8x128xf32>
    %cst_43 = arith.constant 0.000000e+00 : f32
    %140 = vector.broadcast %cst_43 : f32 to vector<8x128xf32>
    %141 = arith.maximumf %139, %140 : vector<8x128xf32>
    %142 = arith.truncf %141 : vector<8x128xf32> to vector<8x128xbf16>
    %cst_44 = arith.constant dense<0.000000e+00> : vector<8x128xf32>
    %143 = tpu.matmul %142, %6, %cst_44 {dimension_numbers = #tpu.dot_dimension_numbers<[1], [0], [0], [1], [0, 0, 1, 1], [], []>} : vector<8x128xbf16>, vector<128x128xbf16>, vector<8x128xf32> -> vector<8x128xf32>
    %144 = vector.broadcast %7 : vector<1x128xf32> to vector<8x128xf32>
    %145 = arith.addf %143, %144 : vector<8x128xf32>
    %cst_45 = arith.constant 0.000000e+00 : f32
    %146 = vector.broadcast %cst_45 : f32 to vector<8x128xf32>
    %147 = arith.maximumf %145, %146 : vector<8x128xf32>
    %cst_46 = arith.constant 0.000000e+00 : f32
    %148 = vector.shape_cast %131 : vector<8x1xi1> to vector<8x1xi1>
    %149 = vector.broadcast %148 : vector<8x1xi1> to vector<8x128xi1>
    %150 = vector.broadcast %cst_46 : f32 to vector<8x128xf32>
    %151 = arith.select %149, %147, %150 : vector<8x128xi1>, vector<8x128xf32>
    %152 = arith.maximumf %128, %151 : vector<8x128xf32>
    %153 = vector.extract_strided_slice %1 {offsets = [0, 6], sizes = [8, 1], strides = [1, 1]} : vector<8x8xi32> to vector<8x1xi32>
    %c0_i32_47 = arith.constant 0 : i32
    %154 = vector.broadcast %c0_i32_47 : i32 to vector<8x1xi32>
    %155 = arith.cmpi sge, %153, %154 : vector<8x1xi32>
    %c0_i32_48 = arith.constant 0 : i32
    %156 = vector.broadcast %c0_i32_48 : i32 to vector<8x1xi32>
    %157 = arith.select %155, %153, %156 : vector<8x1xi1>, vector<8x1xi32>
    %158 = vector.shape_cast %157 : vector<8x1xi32> to vector<8x1xi32>
    %159 = vector.broadcast %158 : vector<8x1xi32> to vector<8x128xi32>
    %160 = vector.shape_cast %159 : vector<8x128xi32> to vector<8x128x1xi32>
    %161 = vector.shape_cast %160 : vector<8x128x1xi32> to vector<8x128xi32>
    %162 = tpu.dynamic_gather %3[%161] in [0] : vector<8x128xf32>, vector<8x128xi32> -> vector<8x128xf32>
    %163 = arith.addf %162, %5 : vector<8x128xf32>
    %cst_49 = arith.constant 0.000000e+00 : f32
    %164 = vector.broadcast %cst_49 : f32 to vector<8x128xf32>
    %165 = arith.maximumf %163, %164 : vector<8x128xf32>
    %166 = arith.truncf %165 : vector<8x128xf32> to vector<8x128xbf16>
    %cst_50 = arith.constant dense<0.000000e+00> : vector<8x128xf32>
    %167 = tpu.matmul %166, %6, %cst_50 {dimension_numbers = #tpu.dot_dimension_numbers<[1], [0], [0], [1], [0, 0, 1, 1], [], []>} : vector<8x128xbf16>, vector<128x128xbf16>, vector<8x128xf32> -> vector<8x128xf32>
    %168 = vector.broadcast %7 : vector<1x128xf32> to vector<8x128xf32>
    %169 = arith.addf %167, %168 : vector<8x128xf32>
    %cst_51 = arith.constant 0.000000e+00 : f32
    %170 = vector.broadcast %cst_51 : f32 to vector<8x128xf32>
    %171 = arith.maximumf %169, %170 : vector<8x128xf32>
    %cst_52 = arith.constant 0.000000e+00 : f32
    %172 = vector.shape_cast %155 : vector<8x1xi1> to vector<8x1xi1>
    %173 = vector.broadcast %172 : vector<8x1xi1> to vector<8x128xi1>
    %174 = vector.broadcast %cst_52 : f32 to vector<8x128xf32>
    %175 = arith.select %173, %171, %174 : vector<8x128xi1>, vector<8x128xf32>
    %176 = arith.maximumf %152, %175 : vector<8x128xf32>
    %177 = vector.extract_strided_slice %1 {offsets = [0, 7], sizes = [8, 1], strides = [1, 1]} : vector<8x8xi32> to vector<8x1xi32>
    %c0_i32_53 = arith.constant 0 : i32
    %178 = vector.broadcast %c0_i32_53 : i32 to vector<8x1xi32>
    %179 = arith.cmpi sge, %177, %178 : vector<8x1xi32>
    %c0_i32_54 = arith.constant 0 : i32
    %180 = vector.broadcast %c0_i32_54 : i32 to vector<8x1xi32>
    %181 = arith.select %179, %177, %180 : vector<8x1xi1>, vector<8x1xi32>
    %182 = vector.shape_cast %181 : vector<8x1xi32> to vector<8x1xi32>
    %183 = vector.broadcast %182 : vector<8x1xi32> to vector<8x128xi32>
    %184 = vector.shape_cast %183 : vector<8x128xi32> to vector<8x128x1xi32>
    %185 = vector.shape_cast %184 : vector<8x128x1xi32> to vector<8x128xi32>
    %186 = tpu.dynamic_gather %3[%185] in [0] : vector<8x128xf32>, vector<8x128xi32> -> vector<8x128xf32>
    %187 = arith.addf %186, %5 : vector<8x128xf32>
    %cst_55 = arith.constant 0.000000e+00 : f32
    %188 = vector.broadcast %cst_55 : f32 to vector<8x128xf32>
    %189 = arith.maximumf %187, %188 : vector<8x128xf32>
    %190 = arith.truncf %189 : vector<8x128xf32> to vector<8x128xbf16>
    %cst_56 = arith.constant dense<0.000000e+00> : vector<8x128xf32>
    %191 = tpu.matmul %190, %6, %cst_56 {dimension_numbers = #tpu.dot_dimension_numbers<[1], [0], [0], [1], [0, 0, 1, 1], [], []>} : vector<8x128xbf16>, vector<128x128xbf16>, vector<8x128xf32> -> vector<8x128xf32>
    %192 = vector.broadcast %7 : vector<1x128xf32> to vector<8x128xf32>
    %193 = arith.addf %191, %192 : vector<8x128xf32>
    %cst_57 = arith.constant 0.000000e+00 : f32
    %194 = vector.broadcast %cst_57 : f32 to vector<8x128xf32>
    %195 = arith.maximumf %193, %194 : vector<8x128xf32>
    %cst_58 = arith.constant 0.000000e+00 : f32
    %196 = vector.shape_cast %179 : vector<8x1xi1> to vector<8x1xi1>
    %197 = vector.broadcast %196 : vector<8x1xi1> to vector<8x128xi1>
    %198 = vector.broadcast %cst_58 : f32 to vector<8x128xf32>
    %199 = arith.select %197, %195, %198 : vector<8x128xi1>, vector<8x128xf32>
    %200 = arith.maximumf %176, %199 : vector<8x128xf32>
    %c0_59 = arith.constant 0 : index
    %c0_60 = arith.constant 0 : index
    %c0_61 = arith.constant 0 : index
    %201 = vector.load %arg7[%c0_59, %c0_60, %c0_61] : memref<1x8x128xf32, #tpu.memory_space<vmem>>, vector<1x8x128xf32>
    %202 = vector.shape_cast %201 : vector<1x8x128xf32> to vector<8x128xf32>
    %203 = vector.shape_cast %200 : vector<8x128xf32> to vector<1x8x128xf32>
    tpu.vector_store %arg7[%c0_59, %c0_60, %c0_61], %203 {strides = array<i32>} : memref<1x8x128xf32, #tpu.memory_space<vmem>>, vector<1x8x128xf32>,
    return
  }
  func.func @transform_0(%arg0: i32, %arg1: i32) -> (i32, i32, i32) {
    %c0_i32 = arith.constant 0 : i32
    %c0_i32_0 = arith.constant 0 : i32
    return %arg0, %arg1, %c0_i32 : i32, i32, i32
  }
  func.func @transform_1(%arg0: i32, %arg1: i32) -> (i32, i32, i32) {
    %c0_i32 = arith.constant 0 : i32
    %c0_i32_0 = arith.constant 0 : i32
    %c0_i32_1 = arith.constant 0 : i32
    return %arg0, %c0_i32, %c0_i32_0 : i32, i32, i32
  }
  func.func @transform_2(%arg0: i32, %arg1: i32) -> (i32, i32, i32) {
    %c0_i32 = arith.constant 0 : i32
    %c0_i32_0 = arith.constant 0 : i32
    return %arg0, %arg1, %c0_i32 : i32, i32, i32
  }
  func.func @transform_3(%arg0: i32, %arg1: i32) -> (i32, i32) {
    %c0_i32 = arith.constant 0 : i32
    %c0_i32_0 = arith.constant 0 : i32
    %c0_i32_1 = arith.constant 0 : i32
    return %c0_i32, %c0_i32_0 : i32, i32
  }
  func.func @transform_4(%arg0: i32, %arg1: i32) -> (i32, i32) {
    %c0_i32 = arith.constant 0 : i32
    %c0_i32_0 = arith.constant 0 : i32
    %c0_i32_1 = arith.constant 0 : i32
    return %c0_i32, %c0_i32_0 : i32, i32
  }
  func.func @transform_5(%arg0: i32, %arg1: i32) -> (i32, i32, i32) {
    %c0_i32 = arith.constant 0 : i32
    %c0_i32_0 = arith.constant 0 : i32
    return %arg0, %arg1, %c0_i32 : i32, i32, i32
  }
}

</mosaic_0001>

<llo_original>
// kernel: tpu_custom_call.1
$region0: #{tpu_custom_call.1}
  #allocation0 [shape = 'u32[]', space=smem, size = 0x4, offset = 0x4, fixed_abs, tag = 'smem constant byte address 0x4 - core index']
  #allocation1 [shape = 'u32[144,128]{1,0:T(1,128)}', space=vmem, size = 0x12000, scoped, tag = 'internal scratch']
  %s0 = inlined_call_operand.hbm [shape: s32[2,8,8], index: 0, kind: input, shape index: {}]
  %s1 = inlined_call_operand.hbm [shape: f32[2,8,128], index: 1, kind: input, shape index: {}]
  %s2 = inlined_call_operand.hbm [shape: f32[2,8,128], index: 2, kind: input, shape index: {}]
  %s3 = inlined_call_operand.hbm [shape: bf16[128,128], index: 3, kind: input, shape index: {}]
  %s4 = inlined_call_operand.vmem [shape: f32[1,128], index: 4, kind: input, shape index: {}]
  %s5 = inlined_call_operand.hbm [shape: f32[2,8,128], index: 5, kind: output, shape index: {}]
  %s6 = sld [smem:[#allocation0]]
  $region69: #{tpu_custom_call.1} parent=0
    _
  %s8 = ssub.s32 1, %s6
  %s9 = scalar_select 0, %s8, %s6
  $region1: #{tpu_custom_call.1} parent=0
    #allocation2 [shape = 'u8[8192]{0}', space=vmem, size = 0x2000, scoped, tag = 'input window, operand 0']
    #allocation3 [shape = 's32[2]{0}', space=sflag, size = 0x8, scoped, tag = 'scoped memory for tpu_custom_call.1']
    #allocation4 [shape = 's32[2]{0}', space=sflag, size = 0x8, scoped, tag = 'scoped memory for tpu_custom_call.1']
    #allocation5 [shape = 'u8[8192]{0}', space=vmem, size = 0x2000, scoped, tag = 'input window, operand 1']
    #allocation6 [shape = 's32[2]{0}', space=sflag, size = 0x8, scoped, tag = 'scoped memory for tpu_custom_call.1']
    #allocation7 [shape = 'u8[8192]{0}', space=vmem, size = 0x2000, scoped, tag = 'input window, operand 2']
    #allocation8 [shape = 'u8[32768]{0}', space=vmem, size = 0x8000, scoped, tag = 'input window, operand 3, single buffered']
    #allocation9 [shape = 's32[1]{0}', space=sflag, size = 0x4, scoped, tag = 'scoped memory for tpu_custom_call.1']
    #allocation10 [shape = 'u8[8192]{0}', space=vmem, size = 0x2000, scoped, tag = 'output window, operand 0']
    %10 = vsyncpa [#allocation3], 0
    %s11 = scalar_lea.sflag [#allocation3], 1
    %12 = vsyncpa %s11, 0
    %13 = vsyncpa [#allocation6], 0
    %s14 = scalar_lea.sflag [#allocation6], 1
    %15 = vsyncpa %s14, 0
    %16 = vsyncpa [#allocation9], 0
    %17 = vsyncpa [#allocation4], 0
    %s18 = scalar_lea.sflag [#allocation4], 1
    %19 = vsyncpa %s18, 0
    loop: start=0, step=1, limit=4
    $region2: #{tpu_custom_call.1} parent=1 // loop_pre_header
      _
    $region3: #{tpu_custom_call.1} parent=1 // loop_header
      %s21 = sphi 0, %s25
      %p22 = scmp.ge.s32.totalorder %s21, 4
      %s28 = sphi 0, %s40
      %s29 = sphi 0, %s36
      %s30 = sphi 0, %s28
      %s31 = sphi 0, %s29
      %s32 = sphi 0, %s30
      %s33 = sphi 0, %s31
      %s45 = sphi 0, %s47
      %s48 = sphi 0, %s45
      %s49 = sphi 0, %s48
      %s65 = sphi 0, %s49
      %s71 = sphi 0, %s73
      %s74 = sphi 0, %s71
      %s75 = sphi 0, %s74
      %s91 = sphi 0, %s75
      %s99 = sphi 0, %s101
      %s102 = sphi 0, %s99
      %s103 = sphi 0, %s102
      %s119 = sphi 0, %s103
      %s123 = sphi 0, %s123
      %s125 = sphi 0, %s123
      %s126 = sphi 0, %s125
      %s140 = sphi 0, %s126
      %s144 = sphi 0, %s144
      %s146 = sphi 0, %s144
      %s147 = sphi 0, %s146
      %s161 = sphi 0, %s147
      %s169 = sphi 0, %s171
      %s172 = sphi 0, %s169
      %s173 = sphi 0, %s172
      %s189 = sphi 0, %s173
    $region4: #{tpu_custom_call.1} parent=1 // loop_header_branch
      %24 = sbr.rel (%p22) target = $region8
    $region5: #{tpu_custom_call.1} parent=1 // loop_body
      %s26 = ssub.s32 %s21, 1
      %s27 = ssub.s32 %s21, 2
      %s34 = sadd.s32 1, %s29
      %p35 = scmp.ge.s32.totalorder %s34, 1
      %s36 = scalar_select %p35, 0, %s34
      %s37 = sadd.s32 1, %s28
      %s38 = scalar_select %p35, %s37, %s28
      %p39 = scmp.ge.s32.totalorder %s38, 2
      %s40 = scalar_select %p39, 0, %s38
      %s41 = ssub.s32 %s28, %s40
      %s42 = ssub.s32 %s29, %s36
      %s43 = sor.u32 %s41, %s42
      %p44 = scmp.eq.s32.totalorder %s43, 0
      %s46 = sadd.s32 %s45, 1
      %s47 = scalar_select %p44, %s45, %s46
      %p50 = pneg %p44
      %p51 = scmp.eq.s32.totalorder %s21, 1
      %p52 = por %p50, %p51
      %p53 = scmp.ne.s32.totalorder %s45, %s48
      %p54 = scmp.eq.s32.totalorder %s21, 0
      %p55 = por %p53, %p54
      %p56 = scmp.ne.s32.totalorder %s45, %s48
      %p57 = scmp.eq.s32.totalorder %s26, 1
      %p58 = por %p56, %p57
      %p59 = scmp.ne.s32.totalorder %s48, %s49
      %p60 = scmp.eq.s32.totalorder %s26, 0
      %p61 = por %p59, %p60
      %p62 = scmp.ne.s32.totalorder %s48, %s49
      %p63 = scmp.eq.s32.totalorder %s27, 1
      %p64 = por %p62, %p63
      %p66 = scmp.ne.s32.totalorder %s49, %s65
      %p67 = scmp.eq.s32.totalorder %s27, 0
      %p68 = por %p66, %p67
      %s69 = ssub.s32 %s28, %s40
      %p70 = scmp.eq.s32.totalorder %s69, 0
      %s72 = sadd.s32 %s71, 1
      %s73 = scalar_select %p70, %s71, %s72
      %p76 = pneg %p70
      %p77 = scmp.eq.s32.totalorder %s21, 1
      %p78 = por %p76, %p77
      %p79 = scmp.ne.s32.totalorder %s71, %s74
      %p80 = scmp.eq.s32.totalorder %s21, 0
      %p81 = por %p79, %p80
      %p82 = scmp.ne.s32.totalorder %s71, %s74
      %p83 = scmp.eq.s32.totalorder %s26, 1
      %p84 = por %p82, %p83
      %p85 = scmp.ne.s32.totalorder %s74, %s75
      %p86 = scmp.eq.s32.totalorder %s26, 0
      %p87 = por %p85, %p86
      %p88 = scmp.ne.s32.totalorder %s74, %s75
      %p89 = scmp.eq.s32.totalorder %s27, 1
      %p90 = por %p88, %p89
      %p92 = scmp.ne.s32.totalorder %s75, %s91
      %p93 = scmp.eq.s32.totalorder %s27, 0
      %p94 = por %p92, %p93
      %s95 = ssub.s32 %s28, %s40
      %s96 = ssub.s32 %s29, %s36
      %s97 = sor.u32 %s95, %s96
      %p98 = scmp.eq.s32.totalorder %s97, 0
      %s100 = sadd.s32 %s99, 1
      %s101 = scalar_select %p98, %s99, %s100
      %p104 = pneg %p98
      %p105 = scmp.eq.s32.totalorder %s21, 1
      %p106 = por %p104, %p105
      %p107 = scmp.ne.s32.totalorder %s99, %s102
      %p108 = scmp.eq.s32.totalorder %s21, 0
      %p109 = por %p107, %p108
      %p110 = scmp.ne.s32.totalorder %s99, %s102
      %p111 = scmp.eq.s32.totalorder %s26, 1
      %p112 = por %p110, %p111
      %p113 = scmp.ne.s32.totalorder %s102, %s103
      %p114 = scmp.eq.s32.totalorder %s26, 0
      %p115 = por %p113, %p114
      %p116 = scmp.ne.s32.totalorder %s102, %s103
      %p117 = scmp.eq.s32.totalorder %s27, 1
      %p118 = por %p116, %p117
      %p120 = scmp.ne.s32.totalorder %s103, %s119
      %p121 = scmp.eq.s32.totalorder %s27, 0
      %p122 = por %p120, %p121
      %s124 = sadd.s32 %s123, 1
      %p127 = scmp.eq.s32.totalorder %s21, 1
      %p128 = scmp.ne.s32.totalorder %s123, %s125
      %p129 = scmp.eq.s32.totalorder %s21, 0
      %p130 = por %p128, %p129
      %p131 = scmp.ne.s32.totalorder %s123, %s125
      %p132 = scmp.eq.s32.totalorder %s26, 1
      %p133 = por %p131, %p132
      %p134 = scmp.ne.s32.totalorder %s125, %s126
      %p135 = scmp.eq.s32.totalorder %s26, 0
      %p136 = por %p134, %p135
      %p137 = scmp.ne.s32.totalorder %s125, %s126
      %p138 = scmp.eq.s32.totalorder %s27, 1
      %p139 = por %p137, %p138
      %p141 = scmp.ne.s32.totalorder %s126, %s140
      %p142 = scmp.eq.s32.totalorder %s27, 0
      %p143 = por %p141, %p142
      %s145 = sadd.s32 %s144, 1
      %p148 = scmp.eq.s32.totalorder %s21, 1
      %p149 = scmp.ne.s32.totalorder %s144, %s146
      %p150 = scmp.eq.s32.totalorder %s21, 0
      %p151 = por %p149, %p150
      %p152 = scmp.ne.s32.totalorder %s144, %s146
      %p153 = scmp.eq.s32.totalorder %s26, 1
      %p154 = por %p152, %p153
      %p155 = scmp.ne.s32.totalorder %s146, %s147
      %p156 = scmp.eq.s32.totalorder %s26, 0
      %p157 = por %p155, %p156
      %p158 = scmp.ne.s32.totalorder %s146, %s147
      %p159 = scmp.eq.s32.totalorder %s27, 1
      %p160 = por %p158, %p159
      %p162 = scmp.ne.s32.totalorder %s147, %s161
      %p163 = scmp.eq.s32.totalorder %s27, 0
      %p164 = por %p162, %p163
      %s165 = ssub.s32 %s28, %s40
      %s166 = ssub.s32 %s29, %s36
      %s167 = sor.u32 %s165, %s166
      %p168 = scmp.eq.s32.totalorder %s167, 0
      %s170 = sadd.s32 %s169, 1
      %s171 = scalar_select %p168, %s169, %s170
      %p174 = pneg %p168
      %p175 = scmp.eq.s32.totalorder %s21, 1
      %p176 = por %p174, %p175
      %p177 = scmp.ne.s32.totalorder %s169, %s172
      %p178 = scmp.eq.s32.totalorder %s21, 0
      %p179 = por %p177, %p178
      %p180 = scmp.ne.s32.totalorder %s169, %s172
      %p181 = scmp.eq.s32.totalorder %s26, 1
      %p182 = por %p180, %p181
      %p183 = scmp.ne.s32.totalorder %s172, %s173
      %p184 = scmp.eq.s32.totalorder %s26, 0
      %p185 = por %p183, %p184
      %p186 = scmp.ne.s32.totalorder %s172, %s173
      %p187 = scmp.eq.s32.totalorder %s27, 1
      %p188 = por %p186, %p187
      %p190 = scmp.ne.s32.totalorder %s173, %s189
      %p191 = scmp.eq.s32.totalorder %s27, 0
      %p192 = por %p190, %p191
      %p193 = scmp.le.s32.totalorder 1, %s21
      %p194 = scmp.lt.s32.totalorder %s21, 3
      %p195 = pnand %p193, %p194
      %p196 = pneg %p195
      // Predicated region
      $region9: #{tpu_custom_call.1} parent=5 // pred_check
        _
      $region10: #{tpu_custom_call.1} parent=5 // pred_check_branch
        %198 = sbr.rel (%p195) target = $region12
      $region11: #{tpu_custom_call.1} parent=5 // pred_region
        %s199 = ssub.s32 %s21, 1
        // Predicated region
        $region13: #{tpu_custom_call.1} parent=11 // pred_check
          %p200 = pneg %p136
        $region14: #{tpu_custom_call.1} parent=11 // pred_check_branch
          %202 = sbr.rel (%p200) target = $region16
        $region15: #{tpu_custom_call.1} parent=11 // pred_region
          %s204 = ssub.s32 1024, 1024
          %205 = vsyncadd [#allocation9], %s204
          %s206 = sshll.u32 [#allocation8], 4
          %s207 = int_to_ptr.vmem [resolvable:$true] %s206
          %212 = dma.hbm_to_vmem [thread:$0]  %s3, 1024, %s207, [#allocation9], 64, 64, 4
        $region16: #{tpu_custom_call.1} parent=11 // pred_fallthru
          _
        // Predicated region
        $region17: #{tpu_custom_call.1} parent=11 // pred_check
          %p213 = pneg %p157
        $region18: #{tpu_custom_call.1} parent=11 // pred_check_branch
          %215 = sbr.rel (%p213) target = $region20
        $region19: #{tpu_custom_call.1} parent=11 // pred_region
          _
        $region20: #{tpu_custom_call.1} parent=11 // pred_fallthru
          _
      $region12: #{tpu_custom_call.1} parent=5 // pred_fallthru
        _
      %p216 = scmp.lt.s32.totalorder %s21, 2
      // Predicated region
      $region21: #{tpu_custom_call.1} parent=5 // pred_check
        %p217 = pneg %p216
      $region22: #{tpu_custom_call.1} parent=5 // pred_check_branch
        %219 = sbr.rel (%p217) target = $region24
      $region23: #{tpu_custom_call.1} parent=5 // pred_region
        // Predicated region
        $region25: #{tpu_custom_call.1} parent=23 // pred_check
          %p220 = pneg %p55
        $region26: #{tpu_custom_call.1} parent=23 // pred_check_branch
          %222 = sbr.rel (%p220) target = $region28
        $region27: #{tpu_custom_call.1} parent=23 // pred_region
          %s223 = sand.u32 %s45, 1
          %s224 = scalar_lea.sflag [#allocation3], %s223
          %s225 = sand.u32 %s45, 1
          %s226 = smul.addr %s225, 8
          %s227 = scalar_lea.vmem [#allocation2], %s226
          %s229 = ssub.s32 128, 128
          %230 = vsyncadd %s224, %s229
          %s231 = sadd.s32 %s29, %s28
          %s232 = smul.addr %s231, 128
          %s233 = scalar_lea.hbm %s0, %s232
          %s235 = sshll.u32 %s227, 4
          %s236 = int_to_ptr.vmem [resolvable:$true] %s235
          %238 = dma.hbm_to_vmem [thread:$0]  %s233, 128, %s236, %s224
        $region28: #{tpu_custom_call.1} parent=23 // pred_fallthru
          _
        // Predicated region
        $region29: #{tpu_custom_call.1} parent=23 // pred_check
          %p239 = pneg %p81
        $region30: #{tpu_custom_call.1} parent=23 // pred_check_branch
          %241 = sbr.rel (%p239) target = $region32
        $region31: #{tpu_custom_call.1} parent=23 // pred_region
          %s242 = sand.u32 %s21, 1
          %s243 = scalar_lea.sflag [#allocation6], %s242
          %s244 = sand.u32 %s71, 1
          %s245 = smul.addr %s244, 8
          %s246 = scalar_lea.vmem [#allocation5], %s245
          %s248 = ssub.s32 128, 128
          %249 = vsyncadd %s243, %s248
          %s250 = smul.addr %s28, 128
          %s251 = scalar_lea.hbm %s1, %s250
          %s253 = sshll.u32 %s246, 4
          %s254 = int_to_ptr.vmem [resolvable:$true] %s253
          %256 = dma.hbm_to_vmem [thread:$0]  %s251, 128, %s254, %s243
        $region32: #{tpu_custom_call.1} parent=23 // pred_fallthru
          _
        // Predicated region
        $region33: #{tpu_custom_call.1} parent=23 // pred_check
          %p257 = pneg %p109
        $region34: #{tpu_custom_call.1} parent=23 // pred_check_branch
          %259 = sbr.rel (%p257) target = $region36
        $region35: #{tpu_custom_call.1} parent=23 // pred_region
          %s260 = sand.u32 %s21, 1
          %s261 = scalar_lea.sflag [#allocation6], %s260
          %s262 = sand.u32 %s99, 1
          %s263 = smul.addr %s262, 8
          %s264 = scalar_lea.vmem [#allocation7], %s263
          %s266 = ssub.s32 128, 128
          %267 = vsyncadd %s261, %s266
          %s268 = sadd.s32 %s29, %s28
          %s269 = smul.addr %s268, 128
          %s270 = scalar_lea.hbm %s2, %s269
          %s272 = sshll.u32 %s264, 4
          %s273 = int_to_ptr.vmem [resolvable:$true] %s272
          %275 = dma.hbm_to_vmem [thread:$0]  %s270, 128, %s273, %s261
        $region36: #{tpu_custom_call.1} parent=23 // pred_fallthru
          _
      $region24: #{tpu_custom_call.1} parent=5 // pred_fallthru
        _
      %p276 = scmp.le.s32.totalorder 1, %s21
      %p277 = scmp.lt.s32.totalorder %s21, 3
      %p278 = pnand %p276, %p277
      %p279 = pneg %p278
      // Predicated region
      $region37: #{tpu_custom_call.1} parent=5 // pred_check
        _
      $region38: #{tpu_custom_call.1} parent=5 // pred_check_branch
        %281 = sbr.rel (%p278) target = $region40
      $region39: #{tpu_custom_call.1} parent=5 // pred_region
        %s282 = ssub.s32 %s21, 1
        %s283 = sand.u32 %s48, 1
        %s284 = scalar_lea.sflag [#allocation3], %s283
        %s285 = sand.u32 %s48, 1
        %s286 = smul.addr %s285, 8
        %s287 = scalar_lea.vmem [#allocation2], %s286
        // Predicated region
        $region41: #{tpu_custom_call.1} parent=39 // pred_check
          %p288 = pneg %p61
        $region42: #{tpu_custom_call.1} parent=39 // pred_check_branch
          %290 = sbr.rel (%p288) target = $region44
        $region43: #{tpu_custom_call.1} parent=39 // pred_region
          %291 = dma.done %s284, 128
        $region44: #{tpu_custom_call.1} parent=39 // pred_fallthru
          _
        %s292 = sand.u32 %s26, 1
        %s293 = scalar_lea.sflag [#allocation6], %s292
        %s294 = sand.u32 %s74, 1
        %s295 = smul.addr %s294, 8
        %s296 = scalar_lea.vmem [#allocation5], %s295
        // Predicated region
        $region45: #{tpu_custom_call.1} parent=39 // pred_check
          %p297 = pneg %p87
        $region46: #{tpu_custom_call.1} parent=39 // pred_check_branch
          %299 = sbr.rel (%p297) target = $region48
        $region47: #{tpu_custom_call.1} parent=39 // pred_region
          %300 = dma.done %s293, 128
        $region48: #{tpu_custom_call.1} parent=39 // pred_fallthru
          _
        %s301 = sand.u32 %s26, 1
        %s302 = scalar_lea.sflag [#allocation6], %s301
        %s303 = sand.u32 %s102, 1
        %s304 = smul.addr %s303, 8
        %s305 = scalar_lea.vmem [#allocation7], %s304
        // Predicated region
        $region49: #{tpu_custom_call.1} parent=39 // pred_check
          %p306 = pneg %p115
        $region50: #{tpu_custom_call.1} parent=39 // pred_check_branch
          %308 = sbr.rel (%p306) target = $region52
        $region51: #{tpu_custom_call.1} parent=39 // pred_region
          %309 = dma.done %s302, 128
        $region52: #{tpu_custom_call.1} parent=39 // pred_fallthru
          _
        // Predicated region
        $region53: #{tpu_custom_call.1} parent=39 // pred_check
          %p310 = pneg %p136
        $region54: #{tpu_custom_call.1} parent=39 // pred_check_branch
          %312 = sbr.rel (%p310) target = $region56
        $region55: #{tpu_custom_call.1} parent=39 // pred_region
          %313 = dma.done [#allocation9], 1024
        $region56: #{tpu_custom_call.1} parent=39 // pred_fallthru
          _
        %s314 = sand.u32 %s48, 1
        %s315 = scalar_lea.sflag [#allocation3], %s314
        %s316 = sand.u32 %s48, 1
        %s317 = smul.addr %s316, 8
        %s318 = scalar_lea.vmem [#allocation2], %s317
        %p319 = pneg %p61
        %p320 = pneg %p58
        %s321 = sand.u32 %s26, 1
        %s322 = scalar_lea.sflag [#allocation6], %s321
        %s323 = sand.u32 %s74, 1
        %s324 = smul.addr %s323, 8
        %s325 = scalar_lea.vmem [#allocation5], %s324
        %p326 = pneg %p87
        %p327 = pneg %p84
        %s328 = sand.u32 %s26, 1
        %s329 = scalar_lea.sflag [#allocation6], %s328
        %s330 = sand.u32 %s102, 1
        %s331 = smul.addr %s330, 8
        %s332 = scalar_lea.vmem [#allocation7], %s331
        %p333 = pneg %p115
        %p334 = pneg %p112
        %p335 = pneg %p136
        %p336 = pneg %p133
        %p337 = pneg %p157
        %p338 = pneg %p154
        %p339 = pneg %p185
        %p340 = pneg %p182
        %s341 = sand.u32 %s172, 1
        %s342 = scalar_lea.sflag [#allocation4], %s341
        %s343 = sand.u32 %s172, 1
        %s344 = smul.addr %s343, 8
        %s345 = scalar_lea.vmem [#allocation10], %s344
        %v347 = vld [vmem:[%s287] sm:$0xff]
        %v348 = vld [vmem:[%s296] sm:$0xff]
        %v349 = vld [vmem:[%s305] sm:$0xff]
        %v350 = vld [vmem:[#allocation8] sm:$0xf]
        %v351 = vld [vmem:[#allocation8 + $0x4] sm:$0xf]
        %v352 = vld [vmem:[#allocation8 + $0x8] sm:$0xf]
        %v353 = vld [vmem:[#allocation8 + $0xc] sm:$0xf]
        %v354 = vld [vmem:[#allocation8 + $0x10] sm:$0xf]
        %v355 = vld [vmem:[#allocation8 + $0x14] sm:$0xf]
        %v356 = vld [vmem:[#allocation8 + $0x18] sm:$0xf]
        %v357 = vld [vmem:[#allocation8 + $0x1c] sm:$0xf]
        %v358 = vld [vmem:[#allocation8 + $0x20] sm:$0xf]
        %v359 = vld [vmem:[#allocation8 + $0x24] sm:$0xf]
        %v360 = vld [vmem:[#allocation8 + $0x28] sm:$0xf]
        %v361 = vld [vmem:[#allocation8 + $0x2c] sm:$0xf]
        %v362 = vld [vmem:[#allocation8 + $0x30] sm:$0xf]
        %v363 = vld [vmem:[#allocation8 + $0x34] sm:$0xf]
        %v364 = vld [vmem:[#allocation8 + $0x38] sm:$0xf]
        %v365 = vld [vmem:[#allocation8 + $0x3c] sm:$0xf]
        %v366 = vld [vmem:[%s4] sm:$0x1]
        %vm367 = vcmp.ge.s32.totalorder %v347, 0
        %v368 = vsel %vm367, %v347, 0
        %369 = vset.pattern.permute.xlu0 0
        %370 = vperm.xlu0 %369, %v368
        %v371 = vpop.permute.xlu0 %370
        %v372 = vlaneseq
        %v373 = vshrl.u32 %v372, 7
        %v374 = vsub.s32 %v371, %v373
        %v375 = vrot.slane %v348, %v374
        %v376 = vadd.f32 %v375, %v349
        %v377 = vmax.f32 %v376, 0.0
        %v378 = vpack.c.bf16 %v377, %v377
        %v380 = vlaneseq
        %v381 = vshrl.u32 %v380, 7
        %v382 = vsub.s32 0, %v381
        %v383 = vrot.slane %v366, %v382
        %v401 = vunpack.c.l.b16 %v350
        %v402 = vunpack.c.l.b16 %v351
        %v403 = vunpack.c.l.b16 %v352
        %v404 = vunpack.c.l.b16 %v353
        %v405 = vunpack.c.l.b16 %v354
        %v406 = vunpack.c.l.b16 %v355
        %v407 = vunpack.c.l.b16 %v356
        %v408 = vunpack.c.l.b16 %v357
        %v409 = vunpack.c.l.b16 %v358
        %v410 = vunpack.c.l.b16 %v359
        %v411 = vunpack.c.l.b16 %v360
        %v412 = vunpack.c.l.b16 %v361
        %v413 = vunpack.c.l.b16 %v362
        %v414 = vunpack.c.l.b16 %v363
        %v415 = vunpack.c.l.b16 %v364
        %v416 = vunpack.c.l.b16 %v365
        %v417 = vpack.c.b16 %v402, %v401
        %v418 = vpack.c.b16 %v404, %v403
        %v419 = vpack.c.b16 %v406, %v405
        %v420 = vpack.c.b16 %v408, %v407
        %v421 = vpack.c.b16 %v410, %v409
        %v422 = vpack.c.b16 %v412, %v411
        %v423 = vpack.c.b16 %v414, %v413
        %v424 = vpack.c.b16 %v416, %v415
        %433 = vmatprep.subr.bf16.mxu0 0
        %434 = vmatpush1.bf16.msra.mxu0 %v424
        %435 = vmatprep.subr.bf16.mxu0 0
        %436 = vmatpush1.bf16.msra.mxu0 %v423
        %437 = vmatprep.subr.bf16.mxu0 0
        %438 = vmatpush1.bf16.msra.mxu0 %v422
        %439 = vmatprep.subr.bf16.mxu0 0
        %440 = vmatpush1.bf16.msra.mxu0 %v421
        %441 = vmatprep.subr.bf16.mxu0 0
        %442 = vmatpush1.bf16.msra.mxu0 %v420
        %443 = vmatprep.subr.bf16.mxu0 0
        %444 = vmatpush1.bf16.msra.mxu0 %v419
        %445 = vmatprep.subr.bf16.mxu0 0
        %446 = vmatpush1.bf16.msra.mxu0 %v418
        %447 = vmatprep.subr.bf16.mxu0 0
        %448 = vmatpush1.bf16.msra.mxu0 %v417
        %449 = vmatprep.subr.bf16.mxu0 0
        %450 = vmatpush2.bf16.msra.mxu0 0
        %451 = vmatprep.subr.bf16.mxu0 0
        %452 = vmatpush2.bf16.msra.mxu0 0
        %453 = vmatprep.subr.bf16.mxu0 0
        %454 = vmatpush2.bf16.msra.mxu0 0
        %455 = vmatprep.subr.bf16.mxu0 0
        %456 = vmatpush2.bf16.msra.mxu0 0
        %457 = vmatprep.subr.bf16.mxu0 0
        %458 = vmatpush2.bf16.msra.mxu0 0
        %459 = vmatprep.subr.bf16.mxu0 0
        %460 = vmatpush2.bf16.msra.mxu0 0
        %461 = vmatprep.subr.bf16.mxu0 0
        %462 = vmatpush2.bf16.msra.mxu0 0
        %463 = vmatprep.subr.bf16.mxu0 0
        %464 = vmatpush2.bf16.msra.mxu0 0
        %465 = vmatprep.mubr.bf16.mxu0 0
        %466 = vmatmul.mubr.bf16.gmra.mxu0 %v378
        %v467 = vpop.f32.mrf.mxu0
        %v468 = vadd.f32 %v383, %v467
        %v469 = vpop.f32.mrf.mxu0
        %v470 = vpop.f32.mrf.mxu0
        %v471 = vpop.f32.mrf.mxu0
        %472 = vdwg.mxu0
        %v473 = vmax.f32 %v468, 0.0
        %v474 = vsel %vm367, 1, 0
        %475 = vset.pattern.permute.xlu0 0
        %476 = vperm.xlu0 %475, %v474
        %v477 = vpop.permute.xlu0 %476
        %vm478 = vcmp.eq.s32.totalorder %v477, 1
        %v479 = vsel %vm478, %v473, 0.0
        %v480 = vmax.f32 %v479, 0.0
        %481 = vset.pattern.permute.xlu0 1
        %482 = vperm.xlu0 %481, %v368
        %v483 = vpop.permute.xlu0 %482
        %v484 = vlaneseq
        %v485 = vshrl.u32 %v484, 7
        %v486 = vsub.s32 %v483, %v485
        %v487 = vrot.slane %v348, %v486
        %v488 = vadd.f32 %v487, %v349
        %v489 = vmax.f32 %v488, 0.0
        %v490 = vpack.c.bf16 %v489, %v489
        %491 = vmatprep.subr.bf16.mxu0 0
        %492 = vmatpush1.bf16.msra.mxu0 %v424
        %493 = vmatprep.subr.bf16.mxu0 0
        %494 = vmatpush1.bf16.msra.mxu0 %v423
        %495 = vmatprep.subr.bf16.mxu0 0
        %496 = vmatpush1.bf16.msra.mxu0 %v422
        %497 = vmatprep.subr.bf16.mxu0 0
        %498 = vmatpush1.bf16.msra.mxu0 %v421
        %499 = vmatprep.subr.bf16.mxu0 0
        %500 = vmatpush1.bf16.msra.mxu0 %v420
        %501 = vmatprep.subr.bf16.mxu0 0
        %502 = vmatpush1.bf16.msra.mxu0 %v419
        %503 = vmatprep.subr.bf16.mxu0 0
        %504 = vmatpush1.bf16.msra.mxu0 %v418
        %505 = vmatprep.subr.bf16.mxu0 0
        %506 = vmatpush1.bf16.msra.mxu0 %v417
        %507 = vmatprep.subr.bf16.mxu0 0
        %508 = vmatpush2.bf16.msra.mxu0 0
        %509 = vmatprep.subr.bf16.mxu0 0
        %510 = vmatpush2.bf16.msra.mxu0 0
        %511 = vmatprep.subr.bf16.mxu0 0
        %512 = vmatpush2.bf16.msra.mxu0 0
        %513 = vmatprep.subr.bf16.mxu0 0
        %514 = vmatpush2.bf16.msra.mxu0 0
        %515 = vmatprep.subr.bf16.mxu0 0
        %516 = vmatpush2.bf16.msra.mxu0 0
        %517 = vmatprep.subr.bf16.mxu0 0
        %518 = vmatpush2.bf16.msra.mxu0 0
        %519 = vmatprep.subr.bf16.mxu0 0
        %520 = vmatpush2.bf16.msra.mxu0 0
        %521 = vmatprep.subr.bf16.mxu0 0
        %522 = vmatpush2.bf16.msra.mxu0 0
        %523 = vmatprep.mubr.bf16.mxu0 0
        %524 = vmatmul.mubr.bf16.gmra.mxu0 %v490
        %v525 = vpop.f32.mrf.mxu0
        %v526 = vadd.f32 %v383, %v525
        %v527 = vpop.f32.mrf.mxu0
        %v528 = vpop.f32.mrf.mxu0
        %v529 = vpop.f32.mrf.mxu0
        %530 = vdwg.mxu0
        %v531 = vmax.f32 %v526, 0.0
        %532 = vset.pattern.permute.xlu0 1
        %533 = vperm.xlu0 %532, %v474
        %v534 = vpop.permute.xlu0 %533
        %vm535 = vcmp.eq.s32.totalorder %v534, 1
        %v536 = vsel %vm535, %v531, 0.0
        %v537 = vmax.f32 %v480, %v536
        %538 = vset.pattern.permute.xlu0 2
        %539 = vperm.xlu0 %538, %v368
        %v540 = vpop.permute.xlu0 %539
        %v541 = vlaneseq
        %v542 = vshrl.u32 %v541, 7
        %v543 = vsub.s32 %v540, %v542
        %v544 = vrot.slane %v348, %v543
        %v545 = vadd.f32 %v544, %v349
        %v546 = vmax.f32 %v545, 0.0
        %v547 = vpack.c.bf16 %v546, %v546
        %548 = vmatprep.subr.bf16.mxu0 0
        %549 = vmatpush1.bf16.msra.mxu0 %v424
        %550 = vmatprep.subr.bf16.mxu0 0
        %551 = vmatpush1.bf16.msra.mxu0 %v423
        %552 = vmatprep.subr.bf16.mxu0 0
        %553 = vmatpush1.bf16.msra.mxu0 %v422
        %554 = vmatprep.subr.bf16.mxu0 0
        %555 = vmatpush1.bf16.msra.mxu0 %v421
        %556 = vmatprep.subr.bf16.mxu0 0
        %557 = vmatpush1.bf16.msra.mxu0 %v420
        %558 = vmatprep.subr.bf16.mxu0 0
        %559 = vmatpush1.bf16.msra.mxu0 %v419
        %560 = vmatprep.subr.bf16.mxu0 0
        %561 = vmatpush1.bf16.msra.mxu0 %v418
        %562 = vmatprep.subr.bf16.mxu0 0
        %563 = vmatpush1.bf16.msra.mxu0 %v417
        %564 = vmatprep.subr.bf16.mxu0 0
        %565 = vmatpush2.bf16.msra.mxu0 0
        %566 = vmatprep.subr.bf16.mxu0 0
        %567 = vmatpush2.bf16.msra.mxu0 0
        %568 = vmatprep.subr.bf16.mxu0 0
        %569 = vmatpush2.bf16.msra.mxu0 0
        %570 = vmatprep.subr.bf16.mxu0 0
        %571 = vmatpush2.bf16.msra.mxu0 0
        %572 = vmatprep.subr.bf16.mxu0 0
        %573 = vmatpush2.bf16.msra.mxu0 0
        %574 = vmatprep.subr.bf16.mxu0 0
        %575 = vmatpush2.bf16.msra.mxu0 0
        %576 = vmatprep.subr.bf16.mxu0 0
        %577 = vmatpush2.bf16.msra.mxu0 0
        %578 = vmatprep.subr.bf16.mxu0 0
        %579 = vmatpush2.bf16.msra.mxu0 0
        %580 = vmatprep.mubr.bf16.mxu0 0
        %581 = vmatmul.mubr.bf16.gmra.mxu0 %v547
        %v582 = vpop.f32.mrf.mxu0
        %v583 = vadd.f32 %v383, %v582
        %v584 = vpop.f32.mrf.mxu0
        %v585 = vpop.f32.mrf.mxu0
        %v586 = vpop.f32.mrf.mxu0
        %587 = vdwg.mxu0
        %v588 = vmax.f32 %v583, 0.0
        %589 = vset.pattern.permute.xlu0 2
        %590 = vperm.xlu0 %589, %v474
        %v591 = vpop.permute.xlu0 %590
        %vm592 = vcmp.eq.s32.totalorder %v591, 1
        %v593 = vsel %vm592, %v588, 0.0
        %v594 = vmax.f32 %v537, %v593
        %595 = vset.pattern.permute.xlu0 3
        %596 = vperm.xlu0 %595, %v368
        %v597 = vpop.permute.xlu0 %596
        %v598 = vlaneseq
        %v599 = vshrl.u32 %v598, 7
        %v600 = vsub.s32 %v597, %v599
        %v601 = vrot.slane %v348, %v600
        %v602 = vadd.f32 %v601, %v349
        %v603 = vmax.f32 %v602, 0.0
        %v604 = vpack.c.bf16 %v603, %v603
        %605 = vmatprep.subr.bf16.mxu0 0
        %606 = vmatpush1.bf16.msra.mxu0 %v424
        %607 = vmatprep.subr.bf16.mxu0 0
        %608 = vmatpush1.bf16.msra.mxu0 %v423
        %609 = vmatprep.subr.bf16.mxu0 0
        %610 = vmatpush1.bf16.msra.mxu0 %v422
        %611 = vmatprep.subr.bf16.mxu0 0
        %612 = vmatpush1.bf16.msra.mxu0 %v421
        %613 = vmatprep.subr.bf16.mxu0 0
        %614 = vmatpush1.bf16.msra.mxu0 %v420
        %615 = vmatprep.subr.bf16.mxu0 0
        %616 = vmatpush1.bf16.msra.mxu0 %v419
        %617 = vmatprep.subr.bf16.mxu0 0
        %618 = vmatpush1.bf16.msra.mxu0 %v418
        %619 = vmatprep.subr.bf16.mxu0 0
        %620 = vmatpush1.bf16.msra.mxu0 %v417
        %621 = vmatprep.subr.bf16.mxu0 0
        %622 = vmatpush2.bf16.msra.mxu0 0
        %623 = vmatprep.subr.bf16.mxu0 0
        %624 = vmatpush2.bf16.msra.mxu0 0
        %625 = vmatprep.subr.bf16.mxu0 0
        %626 = vmatpush2.bf16.msra.mxu0 0
        %627 = vmatprep.subr.bf16.mxu0 0
        %628 = vmatpush2.bf16.msra.mxu0 0
        %629 = vmatprep.subr.bf16.mxu0 0
        %630 = vmatpush2.bf16.msra.mxu0 0
        %631 = vmatprep.subr.bf16.mxu0 0
        %632 = vmatpush2.bf16.msra.mxu0 0
        %633 = vmatprep.subr.bf16.mxu0 0
        %634 = vmatpush2.bf16.msra.mxu0 0
        %635 = vmatprep.subr.bf16.mxu0 0
        %636 = vmatpush2.bf16.msra.mxu0 0
        %637 = vmatprep.mubr.bf16.mxu0 0
        %638 = vmatmul.mubr.bf16.gmra.mxu0 %v604
        %v639 = vpop.f32.mrf.mxu0
        %v640 = vadd.f32 %v383, %v639
        %v641 = vpop.f32.mrf.mxu0
        %v642 = vpop.f32.mrf.mxu0
        %v643 = vpop.f32.mrf.mxu0
        %644 = vdwg.mxu0
        %v645 = vmax.f32 %v640, 0.0
        %646 = vset.pattern.permute.xlu0 3
        %647 = vperm.xlu0 %646, %v474
        %v648 = vpop.permute.xlu0 %647
        %vm649 = vcmp.eq.s32.totalorder %v648, 1
        %v650 = vsel %vm649, %v645, 0.0
        %v651 = vmax.f32 %v594, %v650
        %652 = vset.pattern.permute.xlu0 4
        %653 = vperm.xlu0 %652, %v368
        %v654 = vpop.permute.xlu0 %653
        %v655 = vlaneseq
        %v656 = vshrl.u32 %v655, 7
        %v657 = vsub.s32 %v654, %v656
        %v658 = vrot.slane %v348, %v657
        %v659 = vadd.f32 %v658, %v349
        %v660 = vmax.f32 %v659, 0.0
        %v661 = vpack.c.bf16 %v660, %v660
        %662 = vmatprep.subr.bf16.mxu0 0
        %663 = vmatpush1.bf16.msra.mxu0 %v424
        %664 = vmatprep.subr.bf16.mxu0 0
        %665 = vmatpush1.bf16.msra.mxu0 %v423
        %666 = vmatprep.subr.bf16.mxu0 0
        %667 = vmatpush1.bf16.msra.mxu0 %v422
        %668 = vmatprep.subr.bf16.mxu0 0
        %669 = vmatpush1.bf16.msra.mxu0 %v421
        %670 = vmatprep.subr.bf16.mxu0 0
        %671 = vmatpush1.bf16.msra.mxu0 %v420
        %672 = vmatprep.subr.bf16.mxu0 0
        %673 = vmatpush1.bf16.msra.mxu0 %v419
        %674 = vmatprep.subr.bf16.mxu0 0
        %675 = vmatpush1.bf16.msra.mxu0 %v418
        %676 = vmatprep.subr.bf16.mxu0 0
        %677 = vmatpush1.bf16.msra.mxu0 %v417
        %678 = vmatprep.subr.bf16.mxu0 0
        %679 = vmatpush2.bf16.msra.mxu0 0
        %680 = vmatprep.subr.bf16.mxu0 0
        %681 = vmatpush2.bf16.msra.mxu0 0
        %682 = vmatprep.subr.bf16.mxu0 0
        %683 = vmatpush2.bf16.msra.mxu0 0
        %684 = vmatprep.subr.bf16.mxu0 0
        %685 = vmatpush2.bf16.msra.mxu0 0
        %686 = vmatprep.subr.bf16.mxu0 0
        %687 = vmatpush2.bf16.msra.mxu0 0
        %688 = vmatprep.subr.bf16.mxu0 0
        %689 = vmatpush2.bf16.msra.mxu0 0
        %690 = vmatprep.subr.bf16.mxu0 0
        %691 = vmatpush2.bf16.msra.mxu0 0
        %692 = vmatprep.subr.bf16.mxu0 0
        %693 = vmatpush2.bf16.msra.mxu0 0
        %694 = vmatprep.mubr.bf16.mxu0 0
        %695 = vmatmul.mubr.bf16.gmra.mxu0 %v661
        %v696 = vpop.f32.mrf.mxu0
        %v697 = vadd.f32 %v383, %v696
        %v698 = vpop.f32.mrf.mxu0
        %v699 = vpop.f32.mrf.mxu0
        %v700 = vpop.f32.mrf.mxu0
        %701 = vdwg.mxu0
        %v702 = vmax.f32 %v697, 0.0
        %703 = vset.pattern.permute.xlu0 4
        %704 = vperm.xlu0 %703, %v474
        %v705 = vpop.permute.xlu0 %704
        %vm706 = vcmp.eq.s32.totalorder %v705, 1
        %v707 = vsel %vm706, %v702, 0.0
        %v708 = vmax.f32 %v651, %v707
        %709 = vset.pattern.permute.xlu0 5
        %710 = vperm.xlu0 %709, %v368
        %v711 = vpop.permute.xlu0 %710
        %v712 = vlaneseq
        %v713 = vshrl.u32 %v712, 7
        %v714 = vsub.s32 %v711, %v713
        %v715 = vrot.slane %v348, %v714
        %v716 = vadd.f32 %v715, %v349
        %v717 = vmax.f32 %v716, 0.0
        %v718 = vpack.c.bf16 %v717, %v717
        %719 = vmatprep.subr.bf16.mxu0 0
        %720 = vmatpush1.bf16.msra.mxu0 %v424
        %721 = vmatprep.subr.bf16.mxu0 0
        %722 = vmatpush1.bf16.msra.mxu0 %v423
        %723 = vmatprep.subr.bf16.mxu0 0
        %724 = vmatpush1.bf16.msra.mxu0 %v422
        %725 = vmatprep.subr.bf16.mxu0 0
        %726 = vmatpush1.bf16.msra.mxu0 %v421
        %727 = vmatprep.subr.bf16.mxu0 0
        %728 = vmatpush1.bf16.msra.mxu0 %v420
        %729 = vmatprep.subr.bf16.mxu0 0
        %730 = vmatpush1.bf16.msra.mxu0 %v419
        %731 = vmatprep.subr.bf16.mxu0 0
        %732 = vmatpush1.bf16.msra.mxu0 %v418
        %733 = vmatprep.subr.bf16.mxu0 0
        %734 = vmatpush1.bf16.msra.mxu0 %v417
        %735 = vmatprep.subr.bf16.mxu0 0
        %736 = vmatpush2.bf16.msra.mxu0 0
        %737 = vmatprep.subr.bf16.mxu0 0
        %738 = vmatpush2.bf16.msra.mxu0 0
        %739 = vmatprep.subr.bf16.mxu0 0
        %740 = vmatpush2.bf16.msra.mxu0 0
        %741 = vmatprep.subr.bf16.mxu0 0
        %742 = vmatpush2.bf16.msra.mxu0 0
        %743 = vmatprep.subr.bf16.mxu0 0
        %744 = vmatpush2.bf16.msra.mxu0 0
        %745 = vmatprep.subr.bf16.mxu0 0
        %746 = vmatpush2.bf16.msra.mxu0 0
        %747 = vmatprep.subr.bf16.mxu0 0
        %748 = vmatpush2.bf16.msra.mxu0 0
        %749 = vmatprep.subr.bf16.mxu0 0
        %750 = vmatpush2.bf16.msra.mxu0 0
        %751 = vmatprep.mubr.bf16.mxu0 0
        %752 = vmatmul.mubr.bf16.gmra.mxu0 %v718
        %v753 = vpop.f32.mrf.mxu0
        %v754 = vadd.f32 %v383, %v753
        %v755 = vpop.f32.mrf.mxu0
        %v756 = vpop.f32.mrf.mxu0
        %v757 = vpop.f32.mrf.mxu0
        %758 = vdwg.mxu0
        %v759 = vmax.f32 %v754, 0.0
        %760 = vset.pattern.permute.xlu0 5
        %761 = vperm.xlu0 %760, %v474
        %v762 = vpop.permute.xlu0 %761
        %vm763 = vcmp.eq.s32.totalorder %v762, 1
        %v764 = vsel %vm763, %v759, 0.0
        %v765 = vmax.f32 %v708, %v764
        %766 = vset.pattern.permute.xlu0 6
        %767 = vperm.xlu0 %766, %v368
        %v768 = vpop.permute.xlu0 %767
        %v769 = vlaneseq
        %v770 = vshrl.u32 %v769, 7
        %v771 = vsub.s32 %v768, %v770
        %v772 = vrot.slane %v348, %v771
        %v773 = vadd.f32 %v772, %v349
        %v774 = vmax.f32 %v773, 0.0
        %v775 = vpack.c.bf16 %v774, %v774
        %776 = vmatprep.subr.bf16.mxu0 0
        %777 = vmatpush1.bf16.msra.mxu0 %v424
        %778 = vmatprep.subr.bf16.mxu0 0
        %779 = vmatpush1.bf16.msra.mxu0 %v423
        %780 = vmatprep.subr.bf16.mxu0 0
        %781 = vmatpush1.bf16.msra.mxu0 %v422
        %782 = vmatprep.subr.bf16.mxu0 0
        %783 = vmatpush1.bf16.msra.mxu0 %v421
        %784 = vmatprep.subr.bf16.mxu0 0
        %785 = vmatpush1.bf16.msra.mxu0 %v420
        %786 = vmatprep.subr.bf16.mxu0 0
        %787 = vmatpush1.bf16.msra.mxu0 %v419
        %788 = vmatprep.subr.bf16.mxu0 0
        %789 = vmatpush1.bf16.msra.mxu0 %v418
        %790 = vmatprep.subr.bf16.mxu0 0
        %791 = vmatpush1.bf16.msra.mxu0 %v417
        %792 = vmatprep.subr.bf16.mxu0 0
        %793 = vmatpush2.bf16.msra.mxu0 0
        %794 = vmatprep.subr.bf16.mxu0 0
        %795 = vmatpush2.bf16.msra.mxu0 0
        %796 = vmatprep.subr.bf16.mxu0 0
        %797 = vmatpush2.bf16.msra.mxu0 0
        %798 = vmatprep.subr.bf16.mxu0 0
        %799 = vmatpush2.bf16.msra.mxu0 0
        %800 = vmatprep.subr.bf16.mxu0 0
        %801 = vmatpush2.bf16.msra.mxu0 0
        %802 = vmatprep.subr.bf16.mxu0 0
        %803 = vmatpush2.bf16.msra.mxu0 0
        %804 = vmatprep.subr.bf16.mxu0 0
        %805 = vmatpush2.bf16.msra.mxu0 0
        %806 = vmatprep.subr.bf16.mxu0 0
        %807 = vmatpush2.bf16.msra.mxu0 0
        %808 = vmatprep.mubr.bf16.mxu0 0
        %809 = vmatmul.mubr.bf16.gmra.mxu0 %v775
        %v810 = vpop.f32.mrf.mxu0
        %v811 = vadd.f32 %v383, %v810
        %v812 = vpop.f32.mrf.mxu0
        %v813 = vpop.f32.mrf.mxu0
        %v814 = vpop.f32.mrf.mxu0
        %815 = vdwg.mxu0
        %v816 = vmax.f32 %v811, 0.0
        %817 = vset.pattern.permute.xlu0 6
        %818 = vperm.xlu0 %817, %v474
        %v819 = vpop.permute.xlu0 %818
        %vm820 = vcmp.eq.s32.totalorder %v819, 1
        %v821 = vsel %vm820, %v816, 0.0
        %v822 = vmax.f32 %v765, %v821
        %823 = vset.pattern.permute.xlu0 7
        %824 = vperm.xlu0 %823, %v368
        %v825 = vpop.permute.xlu0 %824
        %v826 = vlaneseq
        %v827 = vshrl.u32 %v826, 7
        %v828 = vsub.s32 %v825, %v827
        %v829 = vrot.slane %v348, %v828
        %v830 = vadd.f32 %v829, %v349
        %v831 = vmax.f32 %v830, 0.0
        %v832 = vpack.c.bf16 %v831, %v831
        %833 = vmatprep.subr.bf16.mxu0 0
        %834 = vmatpush1.bf16.msra.mxu0 %v424
        %835 = vmatprep.subr.bf16.mxu0 0
        %836 = vmatpush1.bf16.msra.mxu0 %v423
        %837 = vmatprep.subr.bf16.mxu0 0
        %838 = vmatpush1.bf16.msra.mxu0 %v422
        %839 = vmatprep.subr.bf16.mxu0 0
        %840 = vmatpush1.bf16.msra.mxu0 %v421
        %841 = vmatprep.subr.bf16.mxu0 0
        %842 = vmatpush1.bf16.msra.mxu0 %v420
        %843 = vmatprep.subr.bf16.mxu0 0
        %844 = vmatpush1.bf16.msra.mxu0 %v419
        %845 = vmatprep.subr.bf16.mxu0 0
        %846 = vmatpush1.bf16.msra.mxu0 %v418
        %847 = vmatprep.subr.bf16.mxu0 0
        %848 = vmatpush1.bf16.msra.mxu0 %v417
        %849 = vmatprep.subr.bf16.mxu0 0
        %850 = vmatpush2.bf16.msra.mxu0 0
        %851 = vmatprep.subr.bf16.mxu0 0
        %852 = vmatpush2.bf16.msra.mxu0 0
        %853 = vmatprep.subr.bf16.mxu0 0
        %854 = vmatpush2.bf16.msra.mxu0 0
        %855 = vmatprep.subr.bf16.mxu0 0
        %856 = vmatpush2.bf16.msra.mxu0 0
        %857 = vmatprep.subr.bf16.mxu0 0
        %858 = vmatpush2.bf16.msra.mxu0 0
        %859 = vmatprep.subr.bf16.mxu0 0
        %860 = vmatpush2.bf16.msra.mxu0 0
        %861 = vmatprep.subr.bf16.mxu0 0
        %862 = vmatpush2.bf16.msra.mxu0 0
        %863 = vmatprep.subr.bf16.mxu0 0
        %864 = vmatpush2.bf16.msra.mxu0 0
        %865 = vmatprep.mubr.bf16.mxu0 0
        %866 = vmatmul.mubr.bf16.gmra.mxu0 %v832
        %v867 = vpop.f32.mrf.mxu0
        %v868 = vadd.f32 %v383, %v867
        %v869 = vpop.f32.mrf.mxu0
        %v870 = vpop.f32.mrf.mxu0
        %v871 = vpop.f32.mrf.mxu0
        %872 = vdwg.mxu0
        %v873 = vmax.f32 %v868, 0.0
        %874 = vset.pattern.permute.xlu0 7
        %875 = vperm.xlu0 %874, %v474
        %v876 = vpop.permute.xlu0 %875
        %vm877 = vcmp.eq.s32.totalorder %v876, 1
        %v878 = vsel %vm877, %v873, 0.0
        %v879 = vmax.f32 %v822, %v878
        %880 = vst [vmem:[%s345] sm:$0xff] %v879
        %s881 = sand.u32 %s172, 1
        %s882 = scalar_lea.sflag [#allocation4], %s881
        %s883 = sand.u32 %s172, 1
        %s884 = smul.addr %s883, 8
        %s885 = scalar_lea.vmem [#allocation10], %s884
        // Predicated region
        $region57: #{tpu_custom_call.1} parent=39 // pred_check
          %p886 = pneg %p182
        $region58: #{tpu_custom_call.1} parent=39 // pred_check_branch
          %888 = sbr.rel (%p886) target = $region60
        $region59: #{tpu_custom_call.1} parent=39 // pred_region
          %s890 = ssub.s32 128, 128
          %891 = vsyncadd %s882, %s890
          %s892 = sadd.s32 %s31, %s30
          %s893 = smul.addr %s892, 128
          %s894 = scalar_lea.hbm %s5, %s893
          %s896 = sshll.u32 %s885, 4
          %s897 = int_to_ptr.vmem [resolvable:$true] %s896
          %899 = dma.vmem_to_hbm [thread:$0]  %s897, 128, %s894, %s882
        $region60: #{tpu_custom_call.1} parent=39 // pred_fallthru
          _
      $region40: #{tpu_custom_call.1} parent=5 // pred_fallthru
        _
      %p900 = scmp.le.s32.totalorder 2, %s21
      // Predicated region
      $region61: #{tpu_custom_call.1} parent=5 // pred_check
        %p901 = pneg %p900
      $region62: #{tpu_custom_call.1} parent=5 // pred_check_branch
        %903 = sbr.rel (%p901) target = $region64
      $region63: #{tpu_custom_call.1} parent=5 // pred_region
        %s904 = ssub.s32 %s21, 2
        // Predicated region
        $region65: #{tpu_custom_call.1} parent=63 // pred_check
          %p905 = pneg %p188
        $region66: #{tpu_custom_call.1} parent=63 // pred_check_branch
          %907 = sbr.rel (%p905) target = $region68
        $region67: #{tpu_custom_call.1} parent=63 // pred_region
          %s908 = sand.u32 %s173, 1
          %s909 = scalar_lea.sflag [#allocation4], %s908
          %s910 = sand.u32 %s173, 1
          %s911 = smul.addr %s910, 8
          %s912 = scalar_lea.vmem [#allocation10], %s911
          %913 = dma.done %s909, 128
        $region68: #{tpu_custom_call.1} parent=63 // pred_fallthru
          _
      $region64: #{tpu_custom_call.1} parent=5 // pred_fallthru
        _
    $region6: #{tpu_custom_call.1} parent=1 // loop_footer
      %s25 = sadd.s32 1, %s21
    $region7: #{tpu_custom_call.1} parent=1 // loop_footer_branch
      %20 = sbr.rel target = $region3
    $region8: #{tpu_custom_call.1} parent=1 // loop_exit
      _
    %914 = vsyncpa [#allocation3], 1
    %s915 = scalar_lea.sflag [#allocation3], 1
    %916 = vsyncpa %s915, 1
    %917 = vsyncpa [#allocation6], 1
    %s918 = scalar_lea.sflag [#allocation6], 1
    %919 = vsyncpa %s918, 1
    %920 = vsyncpa [#allocation9], 1
    %921 = vsyncpa [#allocation4], 1
    %s922 = scalar_lea.sflag [#allocation4], 1
    %923 = vsyncpa %s922, 1

</llo_original>
